<compile_context>
chip_gen: v7x
topology: tpu7x:2x2x1
jax: 0.10.0
libtpu: 0.0.40
codegen_flags: <defaults>
</compile_context>

<pallas_src>
import functools

import jax
import jax.numpy as jnp
from jax.experimental import pallas as pl
from jax.experimental.pallas import tpu as pltpu

_LANES = 128
_SUBLANES = 8
_VREG = _LANES * _SUBLANES  # 1024 f32 elements per vreg


def _weight_from_abs(abs_t, p):
    """|target|**p with cheap specializations for common exponents."""
    p = float(p)
    if p == 1.0:
        return abs_t
    if p == 2.0:
        return abs_t * abs_t
    if p == 0.5:
        return jnp.sqrt(abs_t)
    if p == 1.5:
        return abs_t * jnp.sqrt(abs_t)
    if p.is_integer() and 1.0 <= p <= 8.0:          # small integer exponents
        r = abs_t
        for _ in range(int(p) - 1):
            r = r * abs_t
        return r
    if (2.0 * p).is_integer() and 0.5 <= p <= 8.0:  # half-integer exponents
        r = jnp.sqrt(abs_t)
        for _ in range(int(p)):
            r = r * abs_t
        return r
    return jnp.power(abs_t, p)   # generic float exponent: exp(p*log|t|) on the EUP


def _twmse_kernel(d_ref, t_ref, out_ref, *, weight_pow, valid_rows,
                  block_rows, inner_rows, need_mask):
    """One (block_rows, 128) tile -> one (8, 256) lane-stacked partial.

    out[:, 0:128)   = sum((d - t)^2 * |t|^p)   over the valid rows of the block
    out[:, 128:256) = sum(|t|^p)
    """
    i = pl.program_id(0)

    def chunk(r0, nrows, masked, num_acc, den_acc):
        d = d_ref[pl.ds(r0, nrows), :].astype(jnp.float32)
        t = t_ref[pl.ds(r0, nrows), :].astype(jnp.float32)
        if masked:
            # Zero out rows past the true extent: Pallas pads the ragged last block
            # with undefined VMEM data.  Use a select (not multiply) so NaN/Inf in
            # the overhang cannot propagate.
            gid = (i * block_rows + r0
                   + jax.lax.broadcasted_iota(jnp.int32, (nrows, _LANES), 0))
            valid = gid < valid_rows
            d = jnp.where(valid, d, 0.0)
            t = jnp.where(valid, t, 0.0)
        abs_t = jnp.abs(t)
        w = _weight_from_abs(abs_t, weight_pow)
        diff = d - t
        dw = diff * diff * w
        # (nrows,128) -> (nrows/8, 8, 128); sum over leading axis = pure VPU adds.
        num_acc = num_acc + jnp.sum(dw.reshape(-1, _SUBLANES, _LANES), axis=0)
        den_acc = den_acc + jnp.sum(w.reshape(-1, _SUBLANES, _LANES), axis=0)
        return num_acc, den_acc

    def run(masked):
        zero = jnp.zeros((_SUBLANES, _LANES), jnp.float32)
        n_full = block_rows // inner_rows
        tail = block_rows - n_full * inner_rows   # static, multiple of 8

        def body(c, carry):
            r0 = pl.multiple_of(c * inner_rows, inner_rows)
            return chunk(r0, inner_rows, masked, *carry)

        acc = (zero, zero)
        if n_full > 0:
            # Rolled loop: keeps live ranges / scratch small even for large blocks.
            acc = jax.lax.fori_loop(0, n_full, body, acc)
        if tail > 0:
            acc = chunk(n_full * inner_rows, tail, masked, *acc)
        # Single lane-dense (8, 256) store: num | den stacked along lanes.
        out_ref[0] = jnp.concatenate(acc, axis=-1)

    if not need_mask:
        run(False)
    else:
        last = pl.num_programs(0) - 1

        @pl.when(i != last)
        def _unmasked():
            run(False)

        @pl.when(i == last)
        def _masked():
            run(True)


def _vmem_capacity_bytes():
    """Best-effort physical-VMEM query; conservative (v7x-sized) fallback."""
    try:
        info = pltpu.get_tpu_info()
        cap = getattr(info, "vmem_capacity_bytes", None)
        if cap:
            return int(cap)
    except Exception:
        pass
    return 64 * 1024 * 1024


def target_weighted_mse_loss(data, target, weight_pow,
                             block_rows=None, inner_rows=512):
    """Pallas implementation of TargetWeightedMSELoss.forward."""
    assert weight_pow > 0, "weight_pow must be a positive number!"
    assert data.shape == target.shape, "data / target shape mismatch"

    n = int(data.size)
    assert n > 0, "empty input"

    # Element count rounded up to whole lanes (128), with a one-vreg minimum so the
    # (rows, 128) slab always has >= 8 rows.  When n is a multiple of 128 (and
    # >= 1024) the reshape below is free -- no extra HBM pass.
    total = max(_VREG, ((n + _LANES - 1) // _LANES) * _LANES)
    rows = total // _LANES
    pad = total - n

    def _prep(x):
        if x.dtype not in (jnp.bfloat16, jnp.float16, jnp.float32):
            x = x.astype(jnp.float32)           # stream bf16/f16/f32 natively
        x = x.reshape(-1)
        if pad:
            # TODO(synk): n % 128 != 0 still pays one zero-pad copy over HBM; a
            # manual-DMA prefix path would remove it for fully ragged sizes.
            x = jnp.pad(x, (0, pad))            # zero pads -> zero weight, zero diff
        return x.reshape(rows, _LANES)

    d2 = _prep(data)
    t2 = _prep(target)
    max_item = max(jnp.dtype(d2.dtype).itemsize, jnp.dtype(t2.dtype).itemsize)

    # ---- chip- and dtype-aware tile selection -------------------------------
    if block_rows is None:
        if _vmem_capacity_bytes() >= 96 * 1024 * 1024:
            per_buffer_bytes = 8 * 1024 * 1024   # v5e / v6e: 128 MiB physical VMEM
        else:
            per_buffer_bytes = 4 * 1024 * 1024   # v7x: 64 MiB physical VMEM
        block_rows = per_buffer_bytes // (_LANES * max_item)
    block_rows = max(_SUBLANES, (int(block_rows) // _SUBLANES) * _SUBLANES)
    block_rows = min(block_rows, max(_SUBLANES, (rows // _SUBLANES) * _SUBLANES))

    num_blocks = pl.cdiv(rows, block_rows)
    # Guarantee >= 2 grid steps so both TensorCores get work on v7x.
    if num_blocks == 1 and rows >= 2 * _SUBLANES:
        block_rows = max(_SUBLANES, ((rows // 2) // _SUBLANES) * _SUBLANES)
        num_blocks = pl.cdiv(rows, block_rows)

    need_mask = (rows % block_rows) != 0

    inner_rows = max(_SUBLANES, (int(inner_rows) // _SUBLANES) * _SUBLANES)
    inner_rows = min(inner_rows, block_rows)

    # 2 inputs x 2 double-buffers x block bytes, plus ~16 MiB of headroom for
    # elementwise temporaries / outputs; never below the 32 MiB scoped default.
    block_bytes = block_rows * _LANES * max_item
    vmem_limit = max(32 * 1024 * 1024, 4 * block_bytes + 16 * 1024 * 1024)

    kernel = functools.partial(
        _twmse_kernel, weight_pow=float(weight_pow), valid_rows=rows,
        block_rows=block_rows, inner_rows=inner_rows, need_mask=need_mask)

    partials = pl.pallas_call(
        kernel,
        grid=(num_blocks,),
        in_specs=[
            pl.BlockSpec((block_rows, _LANES), lambda i: (i, 0)),
            pl.BlockSpec((block_rows, _LANES), lambda i: (i, 0)),
        ],
        out_specs=pl.BlockSpec((1, _SUBLANES, 2 * _LANES), lambda i: (i, 0, 0)),
        out_shape=jax.ShapeDtypeStruct((num_blocks, _SUBLANES, 2 * _LANES),
                                       jnp.float32),
        compiler_params=pltpu.CompilerParams(
            dimension_semantics=("parallel",),      # independent per-block partials
            vmem_limit_bytes=int(vmem_limit),
        ),
    )(d2, t2)

    # Tiny final tree-reduction + divide in plain JAX (better numerics too).
    num = jnp.sum(partials[..., :_LANES])
    den = jnp.sum(partials[..., _LANES:])
    return num / den


def _reference(data, target, weight_pow):
    data = data.astype(jnp.float32)
    target = target.astype(jnp.float32)
    w = jnp.power(jnp.abs(target), weight_pow)
    return jnp.sum((data - target) ** 2 * w) / jnp.sum(w)


if __name__ == "__main__":
    weight_pow = 1.5  # module hyper-parameter (must be > 0); no learnable weights

    key = jax.random.PRNGKey(0)
    k_d0, k_t0, k_d1, k_t1 = jax.random.split(key, 4)

    # NCHW inputs, matching the PyTorch module's expected convention.
    data = jax.random.normal(k_d0, (2, 4, 16, 16), dtype=jnp.float32)
    target = jax.random.normal(k_t0, (2, 4, 16, 16), dtype=jnp.float32)

    loss_fn = jax.jit(lambda d, t: target_weighted_mse_loss(d, t, weight_pow))
    loss = jax.block_until_ready(loss_fn(data, target))
    ref = jax.block_until_ready(_reference(data, target, weight_pow))
    assert jnp.allclose(loss, ref, rtol=1e-5, atol=1e-5), (loss, ref)

    # Ragged size (numel % 128 != 0, ragged last block) to exercise the masked path.
    data_r = jax.random.normal(k_d1, (3, 5, 11, 7), dtype=jnp.float32)
    target_r = jax.random.normal(k_t1, (3, 5, 11, 7), dtype=jnp.float32)
    loss_r = jax.block_until_ready(
        jax.jit(lambda d, t: target_weighted_mse_loss(d, t, weight_pow))(data_r, target_r))
    ref_r = jax.block_until_ready(_reference(data_r, target_r, weight_pow))
    assert jnp.allclose(loss_r, ref_r, rtol=1e-5, atol=1e-5), (loss_r, ref_r)

    print("KERNEL_OK")
</pallas_src>

<mosaic_0001>
module attributes {stable_mosaic.version = 11 : i64} {
  func.func @_twmse_kernel(%arg0: i32, %arg1: memref<8x128xf32, #tpu.memory_space<vmem>>, %arg2: memref<8x128xf32, #tpu.memory_space<vmem>>, %arg3: memref<1x8x256xf32, #tpu.memory_space<vmem>>) attributes {dimension_semantics = [#tpu.dimension_semantics<parallel>], iteration_bounds = array<i64: 2>, scalar_prefetch = 0 : i64, scratch_operands = 0 : i64, tpu.core_type = #tpu.core_type<tc>, window_params = [{transform_indices = @transform_0, window_bounds = array<i64: 8, 128>}, {transform_indices = @transform_1, window_bounds = array<i64: 8, 128>}, {transform_indices = @transform_2, window_bounds = array<i64: 1, 8, 256>}]} {
    %cst = arith.constant 0.000000e+00 : f32
    %0 = vector.broadcast %cst : f32 to vector<8x128xf32>
    %c0_i32 = arith.constant 0 : i32
    %c8_i32 = arith.constant 8 : i32
    %1 = arith.muli %c0_i32, %c8_i32 : i32
    %2 = tpu.assume_multiple %1, 8 : i32
    %3 = arith.index_cast %2 : i32 to index
    %c0 = arith.constant 0 : index
    %4 = vector.load %arg1[%3, %c0] : memref<8x128xf32, #tpu.memory_space<vmem>>, vector<8x128xf32>
    %5 = arith.index_cast %2 : i32 to index
    %c0_0 = arith.constant 0 : index
    %6 = vector.load %arg2[%5, %c0_0] : memref<8x128xf32, #tpu.memory_space<vmem>>, vector<8x128xf32>
    %7 = math.absf %6 : vector<8x128xf32>
    %8 = math.sqrt %7 : vector<8x128xf32>
    %9 = arith.mulf %7, %8 : vector<8x128xf32>
    %10 = arith.subf %4, %6 : vector<8x128xf32>
    %11 = arith.mulf %10, %10 : vector<8x128xf32>
    %12 = arith.mulf %11, %9 : vector<8x128xf32>
    %13 = vector.shape_cast %12 : vector<8x128xf32> to vector<1x8x128xf32>
    %cst_1 = arith.constant dense<0.000000e+00> : vector<8x128xf32>
    %14 = vector.multi_reduction <add>, %13, %cst_1 [0] : vector<1x8x128xf32> to vector<8x128xf32>
    %15 = arith.addf %0, %14 : vector<8x128xf32>
    %16 = vector.shape_cast %9 : vector<8x128xf32> to vector<1x8x128xf32>
    %cst_2 = arith.constant dense<0.000000e+00> : vector<8x128xf32>
    %17 = vector.multi_reduction <add>, %16, %cst_2 [0] : vector<1x8x128xf32> to vector<8x128xf32>
    %18 = arith.addf %0, %17 : vector<8x128xf32>
    %c1_i32 = arith.constant 1 : i32
    %19 = tpu.concatenate %15, %18 in 1 : vector<8x128xf32>, vector<8x128xf32> -> vector<8x256xf32>
    %c0_3 = arith.constant 0 : index
    %c0_4 = arith.constant 0 : index
    %c0_5 = arith.constant 0 : index
    %20 = vector.load %arg3[%c0_3, %c0_4, %c0_5] : memref<1x8x256xf32, #tpu.memory_space<vmem>>, vector<1x8x256xf32>
    %21 = vector.shape_cast %20 : vector<1x8x256xf32> to vector<8x256xf32>
    %22 = vector.shape_cast %19 : vector<8x256xf32> to vector<1x8x256xf32>
    tpu.vector_store %arg3[%c0_3, %c0_4, %c0_5], %22 {strides = array<i32>} : memref<1x8x256xf32, #tpu.memory_space<vmem>>, vector<1x8x256xf32>,
    return
  }
  func.func @transform_0(%arg0: i32) -> (i32, i32) {
    %c0_i32 = arith.constant 0 : i32
    %c0_i32_0 = arith.constant 0 : i32
    return %arg0, %c0_i32 : i32, i32
  }
  func.func @transform_1(%arg0: i32) -> (i32, i32) {
    %c0_i32 = arith.constant 0 : i32
    %c0_i32_0 = arith.constant 0 : i32
    return %arg0, %c0_i32 : i32, i32
  }
  func.func @transform_2(%arg0: i32) -> (i32, i32, i32) {
    %c0_i32 = arith.constant 0 : i32
    %c0_i32_0 = arith.constant 0 : i32
    %c0_i32_1 = arith.constant 0 : i32
    return %arg0, %c0_i32, %c0_i32_0 : i32, i32, i32
  }
}

</mosaic_0001>

<llo_original>
// kernel: _lambda_.1
$region0: #{_lambda_.1}
  #allocation0 [shape = 'u32[]', space=smem, size = 0x4, offset = 0x4, fixed_abs, tag = 'smem constant byte address 0x4 - core index']
  #allocation1 [shape = 'u32[144,128]{1,0:T(1,128)}', space=vmem, size = 0x12000, scoped, tag = 'internal scratch']
  %s0 = inlined_call_operand.vmem [shape: f32[16,128], index: 0, kind: input, shape index: {}]
  %s1 = inlined_call_operand.vmem [shape: f32[16,128], index: 1, kind: input, shape index: {}]
  %s2 = inlined_call_operand.vmem [shape: f32[2,8,256], index: 2, kind: output, shape index: {}]
  %s3 = sld [smem:[#allocation0]]
  $region41: #{_lambda_.1} parent=0
    _
  %s5 = ssub.s32 1, %s3
  %s6 = scalar_select 0, %s5, %s3
  loop: start=0, step=1, limit=4
  $region2: #{_lambda_.1} parent=0 // loop_pre_header
    _
  $region3: #{_lambda_.1} parent=0 // loop_header
    %s8 = sphi 0, %s12
    %p9 = scmp.ge.s32.totalorder %s8, 4
    %s18 = sphi 0, %s20
    %s21 = sphi 0, %s18
    %s22 = sphi 0, %s21
    %s38 = sphi 0, %s22
    %s44 = sphi 0, %s46
    %s47 = sphi 0, %s44
    %s48 = sphi 0, %s47
    %s64 = sphi 0, %s48
    %s70 = sphi 0, %s72
    %s73 = sphi 0, %s70
    %s74 = sphi 0, %s73
    %s90 = sphi 0, %s74
  $region4: #{_lambda_.1} parent=0 // loop_header_branch
    %11 = sbr.rel (%p9) target = $region8
  $region5: #{_lambda_.1} parent=0 // loop_body
    %s13 = ssub.s32 %s8, 1
    %s14 = ssub.s32 %s8, 2
    %s15 = sadd.s32 %s8, 1
    %s16 = ssub.s32 %s8, %s15
    %p17 = scmp.eq.s32.totalorder %s16, 0
    %s19 = sadd.s32 %s18, 1
    %s20 = scalar_select %p17, %s18, %s19
    %p23 = pneg %p17
    %p24 = scmp.eq.s32.totalorder %s8, 1
    %p25 = por %p23, %p24
    %p26 = scmp.ne.s32.totalorder %s18, %s21
    %p27 = scmp.eq.s32.totalorder %s8, 0
    %p28 = por %p26, %p27
    %p29 = scmp.ne.s32.totalorder %s18, %s21
    %p30 = scmp.eq.s32.totalorder %s13, 1
    %p31 = por %p29, %p30
    %p32 = scmp.ne.s32.totalorder %s21, %s22
    %p33 = scmp.eq.s32.totalorder %s13, 0
    %p34 = por %p32, %p33
    %p35 = scmp.ne.s32.totalorder %s21, %s22
    %p36 = scmp.eq.s32.totalorder %s14, 1
    %p37 = por %p35, %p36
    %p39 = scmp.ne.s32.totalorder %s22, %s38
    %p40 = scmp.eq.s32.totalorder %s14, 0
    %p41 = por %p39, %p40
    %s42 = ssub.s32 %s8, %s15
    %p43 = scmp.eq.s32.totalorder %s42, 0
    %s45 = sadd.s32 %s44, 1
    %s46 = scalar_select %p43, %s44, %s45
    %p49 = pneg %p43
    %p50 = scmp.eq.s32.totalorder %s8, 1
    %p51 = por %p49, %p50
    %p52 = scmp.ne.s32.totalorder %s44, %s47
    %p53 = scmp.eq.s32.totalorder %s8, 0
    %p54 = por %p52, %p53
    %p55 = scmp.ne.s32.totalorder %s44, %s47
    %p56 = scmp.eq.s32.totalorder %s13, 1
    %p57 = por %p55, %p56
    %p58 = scmp.ne.s32.totalorder %s47, %s48
    %p59 = scmp.eq.s32.totalorder %s13, 0
    %p60 = por %p58, %p59
    %p61 = scmp.ne.s32.totalorder %s47, %s48
    %p62 = scmp.eq.s32.totalorder %s14, 1
    %p63 = por %p61, %p62
    %p65 = scmp.ne.s32.totalorder %s48, %s64
    %p66 = scmp.eq.s32.totalorder %s14, 0
    %p67 = por %p65, %p66
    %s68 = ssub.s32 %s8, %s15
    %p69 = scmp.eq.s32.totalorder %s68, 0
    %s71 = sadd.s32 %s70, 1
    %s72 = scalar_select %p69, %s70, %s71
    %p75 = pneg %p69
    %p76 = scmp.eq.s32.totalorder %s8, 1
    %p77 = por %p75, %p76
    %p78 = scmp.ne.s32.totalorder %s70, %s73
    %p79 = scmp.eq.s32.totalorder %s8, 0
    %p80 = por %p78, %p79
    %p81 = scmp.ne.s32.totalorder %s70, %s73
    %p82 = scmp.eq.s32.totalorder %s13, 1
    %p83 = por %p81, %p82
    %p84 = scmp.ne.s32.totalorder %s73, %s74
    %p85 = scmp.eq.s32.totalorder %s13, 0
    %p86 = por %p84, %p85
    %p87 = scmp.ne.s32.totalorder %s73, %s74
    %p88 = scmp.eq.s32.totalorder %s14, 1
    %p89 = por %p87, %p88
    %p91 = scmp.ne.s32.totalorder %s74, %s90
    %p92 = scmp.eq.s32.totalorder %s14, 0
    %p93 = por %p91, %p92
    %p94 = scmp.le.s32.totalorder 1, %s8
    %p95 = scmp.lt.s32.totalorder %s8, 3
    %p96 = pnand %p94, %p95
    %p97 = pneg %p96
    // Predicated region
    $region9: #{_lambda_.1} parent=5 // pred_check
      _
    $region10: #{_lambda_.1} parent=5 // pred_check_branch
      %99 = sbr.rel (%p96) target = $region12
    $region11: #{_lambda_.1} parent=5 // pred_region
      %s100 = ssub.s32 %s8, 1
    $region12: #{_lambda_.1} parent=5 // pred_fallthru
      _
    %p101 = scmp.lt.s32.totalorder %s8, 2
    // Predicated region
    $region13: #{_lambda_.1} parent=5 // pred_check
      %p102 = pneg %p101
    $region14: #{_lambda_.1} parent=5 // pred_check_branch
      %104 = sbr.rel (%p102) target = $region16
    $region15: #{_lambda_.1} parent=5 // pred_region
      // Predicated region
      $region17: #{_lambda_.1} parent=15 // pred_check
        %p105 = pneg %p28
      $region18: #{_lambda_.1} parent=15 // pred_check_branch
        %107 = sbr.rel (%p105) target = $region20
      $region19: #{_lambda_.1} parent=15 // pred_region
        %p108 = scmp.lt.s32.totalorder %s8, 1
        %s109 = scalar_select %p108, %s8, 1
        %s110 = smul.addr %s109, 8
        %s111 = scalar_lea.vmem %s0, %s110
      $region20: #{_lambda_.1} parent=15 // pred_fallthru
        _
      // Predicated region
      $region21: #{_lambda_.1} parent=15 // pred_check
        %p112 = pneg %p54
      $region22: #{_lambda_.1} parent=15 // pred_check_branch
        %114 = sbr.rel (%p112) target = $region24
      $region23: #{_lambda_.1} parent=15 // pred_region
        %p115 = scmp.lt.s32.totalorder %s8, 1
        %s116 = scalar_select %p115, %s8, 1
        %s117 = smul.addr %s116, 8
        %s118 = scalar_lea.vmem %s1, %s117
      $region24: #{_lambda_.1} parent=15 // pred_fallthru
        _
    $region16: #{_lambda_.1} parent=5 // pred_fallthru
      _
    %p119 = scmp.le.s32.totalorder 1, %s8
    %p120 = scmp.lt.s32.totalorder %s8, 3
    %p121 = pnand %p119, %p120
    %p122 = pneg %p121
    // Predicated region
    $region25: #{_lambda_.1} parent=5 // pred_check
      _
    $region26: #{_lambda_.1} parent=5 // pred_check_branch
      %124 = sbr.rel (%p121) target = $region28
    $region27: #{_lambda_.1} parent=5 // pred_region
      %s125 = ssub.s32 %s8, 1
      %p126 = scmp.lt.s32.totalorder %s13, 1
      %s127 = scalar_select %p126, %s13, 1
      %s128 = smul.addr %s127, 8
      %s129 = scalar_lea.vmem %s0, %s128
      %p130 = pneg %p34
      %p131 = pneg %p31
      %p132 = scmp.lt.s32.totalorder %s13, 1
      %s133 = scalar_select %p132, %s13, 1
      %s134 = smul.addr %s133, 8
      %s135 = scalar_lea.vmem %s1, %s134
      %p136 = pneg %p60
      %p137 = pneg %p57
      %p138 = pneg %p86
      %p139 = pneg %p83
      %p140 = scmp.lt.s32.totalorder %s13, 1
      %s141 = scalar_select %p140, %s13, 1
      %s142 = smul.addr %s141, 2
      %s143 = smul.addr %s142, 8
      %s144 = scalar_lea.vmem %s2, %s143
      %p145 = scmp.lt.s32.totalorder %s13, 1
      %s146 = scalar_select %p145, %s13, 1
      %s147 = smul.addr %s146, 8
      %s148 = scalar_lea.vmem %s0, %s147
      %p149 = scmp.lt.s32.totalorder %s13, 1
      %s150 = scalar_select %p149, %s13, 1
      %s151 = smul.addr %s150, 8
      %s152 = scalar_lea.vmem %s1, %s151
      %p153 = scmp.lt.s32.totalorder %s13, 1
      %s154 = scalar_select %p153, %s13, 1
      %s155 = smul.addr %s154, 2
      %s156 = smul.addr %s155, 8
      %s157 = scalar_lea.vmem %s2, %s156
      %v158 = vld [vmem:[%s148] sm:$0xff]
      %v159 = vld [vmem:[%s152] sm:$0xff]
      %v160 = vand.u32 2147483647, %v159
      %v161 = vrsqrt.pop %v160
      %v162 = vmul.f32 %v160, %v161
      %vm163 = vcmp.eq.f32.partialorder %v160, inf
      %v164 = vsel %vm163, %v160, %v162
      %vm165 = vcmp.eq.f32.partialorder %v160, 0.0
      %v166 = vand.u32 %v160, 2147483648
      %v167 = vsel %vm165, %v166, %v164
      %v168 = vmul.f32 %v160, %v167
      %v169 = vsub.f32 %v158, %v159
      %v170 = vmul.f32 %v169, %v169
      %v171 = vmul.f32 %v170, %v168
      %v172 = vadd.f32 %v171, 0.0
      %v173 = vadd.f32 %v172, 0.0
      %v174 = vadd.f32 %v168, 0.0
      %v175 = vadd.f32 %v174, 0.0
      %176 = vst [vmem:[%s157] sm:$0xff] %v173
      %177 = vst [vmem:[%s157 + $0x8] sm:$0xff] %v175
      %p178 = scmp.lt.s32.totalorder %s13, 1
      %s179 = scalar_select %p178, %s13, 1
      %s180 = smul.addr %s179, 2
      %s181 = smul.addr %s180, 8
      %s182 = scalar_lea.vmem %s2, %s181
      // Predicated region
      $region29: #{_lambda_.1} parent=27 // pred_check
        %p183 = pneg %p83
      $region30: #{_lambda_.1} parent=27 // pred_check_branch
        %185 = sbr.rel (%p183) target = $region32
      $region31: #{_lambda_.1} parent=27 // pred_region
        _
      $region32: #{_lambda_.1} parent=27 // pred_fallthru
        _
    $region28: #{_lambda_.1} parent=5 // pred_fallthru
      _
    %p186 = scmp.le.s32.totalorder 2, %s8
    // Predicated region
    $region33: #{_lambda_.1} parent=5 // pred_check
      %p187 = pneg %p186
    $region34: #{_lambda_.1} parent=5 // pred_check_branch
      %189 = sbr.rel (%p187) target = $region36
    $region35: #{_lambda_.1} parent=5 // pred_region
      %s190 = ssub.s32 %s8, 2
      // Predicated region
      $region37: #{_lambda_.1} parent=35 // pred_check
        %p191 = pneg %p89
      $region38: #{_lambda_.1} parent=35 // pred_check_branch
        %193 = sbr.rel (%p191) target = $region40
      $region39: #{_lambda_.1} parent=35 // pred_region
        %p194 = scmp.lt.s32.totalorder %s14, 1
        %s195 = scalar_select %p194, %s14, 1
        %s196 = smul.addr %s195, 2
        %s197 = smul.addr %s196, 8
        %s198 = scalar_lea.vmem %s2, %s197
      $region40: #{_lambda_.1} parent=35 // pred_fallthru
        _
    $region36: #{_lambda_.1} parent=5 // pred_fallthru
      _
  $region6: #{_lambda_.1} parent=0 // loop_footer
    %s12 = sadd.s32 1, %s8
  $region7: #{_lambda_.1} parent=0 // loop_footer_branch
    %7 = sbr.rel target = $region3
  $region8: #{_lambda_.1} parent=0 // loop_exit
    _

</llo_original>
